<compile_context>
chip_gen: v5e
topology: v5e:2x2
jax: 0.10.0
libtpu: 0.0.40
codegen_flags: <defaults>
</compile_context>

<pallas_src>
import numpy as np
import jax
import jax.numpy as jnp
from jax import lax
from jax.experimental import pallas as pl
from jax.experimental.pallas import tpu as pltpu

EPS = 1e-6


# ----------------------------- Pallas kernel ---------------------------------
def layernorm_kernel(x_ref, w_ref, b_ref, o_ref):
    # x_ref: (Bt, C, T)  — channels on sublanes, pixels on lanes.
    x = x_ref[...].astype(jnp.float32)                   # stats in f32 even for bf16 I/O
    u = jnp.mean(x, axis=1, keepdims=True)               # per-pixel channel mean (Bt,1,T)
    xc = x - u
    s = jnp.mean(xc * xc, axis=1, keepdims=True)         # per-pixel channel var  (Bt,1,T)
    inv = lax.rsqrt(s + EPS)                             # EUP rsqrt, no divide/sqrt chain
    w = w_ref[...].astype(jnp.float32)[None]              # (1, C, 1)
    b = b_ref[...].astype(jnp.float32)[None]              # (1, C, 1)
    o_ref[...] = (w * (xc * inv) + b).astype(o_ref.dtype)


# ----------------------------- tiling helpers ---------------------------------
def _round_up(x, m):
    return (x + m - 1) // m * m


def _largest_divisor_leq(n, cap):
    cap = max(1, min(n, cap))
    for d in range(cap, 0, -1):
        if n % d == 0:
            return d
    return 1


def _choose_tiling(B, C, HW, itemsize, target_tile_bytes=2 << 20):
    """Pick (Bt, T, HW_pad): lane-dense spatial tile + batch fold, ~target bytes/step."""
    HW_pad = _round_up(HW, 128)
    # largest lane-multiple spatial tile within the per-tile VMEM budget
    max_t = max(128, (target_tile_bytes // (C * itemsize)) // 128 * 128)
    if HW_pad <= max_t:
        T = HW_pad
        # fold batch so each grid step still moves ~target bytes
        bt_cap = max(1, target_tile_bytes // (C * T * itemsize))
        Bt = _largest_divisor_leq(B, bt_cap)
    else:
        T = max_t
        HW_pad = _round_up(HW, T)        # pad so T always divides the spatial extent
        Bt = 1
    # v7x megacore: keep >= 2 grid steps along a parallel axis when possible
    if (B // Bt) * (HW_pad // T) < 2 and B > 1:
        Bt = _largest_divisor_leq(B, B // 2)
    return Bt, T, HW_pad


# ----------------------------- wrapper ----------------------------------------
def layer_norm(x, weight, bias):
    B, C, H, W = x.shape
    HW = H * W
    itemsize = jnp.dtype(x.dtype).itemsize
    Bt, T, HW_pad = _choose_tiling(B, C, HW, itemsize)

    xr = x.reshape(B, C, HW)                 # free reshape, no transpose
    if HW_pad != HW:
        xr = jnp.pad(xr, ((0, 0), (0, 0), (0, HW_pad - HW)))
    w2 = weight.reshape(C, 1)
    b2 = bias.reshape(C, 1)

    grid = (B // Bt, HW_pad // T)
    cost = pl.CostEstimate(
        flops=8 * B * C * HW,
        transcendentals=B * HW,
        bytes_accessed=2 * B * C * HW * itemsize,
    )

    out = pl.pallas_call(
        layernorm_kernel,
        out_shape=jax.ShapeDtypeStruct((B, C, HW_pad), x.dtype),
        grid=grid,
        in_specs=[
            pl.BlockSpec((Bt, C, T), lambda b, t: (b, 0, t)),   # x tile
            pl.BlockSpec((C, 1), lambda b, t: (0, 0)),          # weight (broadcast)
            pl.BlockSpec((C, 1), lambda b, t: (0, 0)),          # bias   (broadcast)
        ],
        out_specs=pl.BlockSpec((Bt, C, T), lambda b, t: (b, 0, t)),
        compiler_params=pltpu.CompilerParams(
            dimension_semantics=("parallel", "parallel"),
            vmem_limit_bytes=32 << 20,
        ),
        cost_estimate=cost,
    )(xr, w2, b2)

    if HW_pad != HW:
        out = out[:, :, :HW]
    return out.reshape(B, C, H, W)


# ----------------------------- pure-JAX reference ------------------------------
def reference(x, weight, bias):
    u = x.mean(1, keepdims=True)
    s = ((x - u) ** 2).mean(1, keepdims=True)
    xn = (x - u) / jnp.sqrt(s + EPS)
    return weight[None, :, None, None] * xn + bias[None, :, None, None]


if __name__ == "__main__":
    key = jax.random.PRNGKey(0)
    kx, kw, kb, kx2 = jax.random.split(key, 4)
    DIM = 64                                   # module default dim=64
    weight = 1.0 + 0.1 * jax.random.normal(kw, (DIM,), jnp.float32)
    bias = 0.1 * jax.random.normal(kb, (DIM,), jnp.float32)

    run = jax.jit(lambda xx: layer_norm(xx, weight, bias))

    # main check: 128-divisible spatial size
    x = jax.random.normal(kx, (2, DIM, 16, 16), jnp.float32)
    out = jax.block_until_ready(run(x))
    np.testing.assert_allclose(np.asarray(out), np.asarray(reference(x, weight, bias)),
                               atol=1e-4, rtol=1e-4)

    # padding path: H*W not a multiple of 128
    x2 = jax.random.normal(kx2, (2, DIM, 15, 15), jnp.float32)
    out2 = jax.block_until_ready(run(x2))
    np.testing.assert_allclose(np.asarray(out2), np.asarray(reference(x2, weight, bias)),
                               atol=1e-4, rtol=1e-4)

    print("KERNEL_OK")
</pallas_src>

<mosaic_0001>
module attributes {stable_mosaic.version = 11 : i64} {
  func.func @layernorm_kernel(%arg0: i32, %arg1: i32, %arg2: memref<1x64x256xf32, #tpu.memory_space<vmem>>, %arg3: memref<64x1xf32, #tpu.memory_space<vmem>>, %arg4: memref<64x1xf32, #tpu.memory_space<vmem>>, %arg5: memref<1x64x256xf32, #tpu.memory_space<vmem>>) attributes {dimension_semantics = [#tpu.dimension_semantics<parallel>, #tpu.dimension_semantics<parallel>], iteration_bounds = array<i64: 2, 1>, scalar_prefetch = 0 : i64, scratch_operands = 0 : i64, tpu.core_type = #tpu.core_type<tc>, window_params = [{transform_indices = @transform_0, window_bounds = array<i64: 1, 64, 256>}, {pipeline_mode = #tpu.pipeline_mode<synchronous>, transform_indices = @transform_1, window_bounds = array<i64: 64, 1>}, {pipeline_mode = #tpu.pipeline_mode<synchronous>, transform_indices = @transform_2, window_bounds = array<i64: 64, 1>}, {transform_indices = @transform_3, window_bounds = array<i64: 1, 64, 256>}]} {
    %c0 = arith.constant 0 : index
    %c0_0 = arith.constant 0 : index
    %c0_1 = arith.constant 0 : index
    %0 = vector.load %arg2[%c0, %c0_0, %c0_1] : memref<1x64x256xf32, #tpu.memory_space<vmem>>, vector<1x64x256xf32>
    %cst = arith.constant dense<0.000000e+00> : vector<1x256xf32>
    %1 = vector.multi_reduction <add>, %0, %cst [1] : vector<1x64x256xf32> to vector<1x256xf32>
    %2 = vector.shape_cast %1 : vector<1x256xf32> to vector<1x1x256xf32>
    %cst_2 = arith.constant 6.400000e+01 : f32
    %3 = vector.broadcast %cst_2 : f32 to vector<1x1x256xf32>
    %4 = arith.divf %2, %3 : vector<1x1x256xf32>
    %5 = vector.broadcast %4 : vector<1x1x256xf32> to vector<1x64x256xf32>
    %6 = arith.subf %0, %5 : vector<1x64x256xf32>
    %7 = arith.mulf %6, %6 : vector<1x64x256xf32>
    %cst_3 = arith.constant dense<0.000000e+00> : vector<1x256xf32>
    %8 = vector.multi_reduction <add>, %7, %cst_3 [1] : vector<1x64x256xf32> to vector<1x256xf32>
    %9 = vector.shape_cast %8 : vector<1x256xf32> to vector<1x1x256xf32>
    %cst_4 = arith.constant 6.400000e+01 : f32
    %10 = vector.broadcast %cst_4 : f32 to vector<1x1x256xf32>
    %11 = arith.divf %9, %10 : vector<1x1x256xf32>
    %cst_5 = arith.constant 9.99999997E-7 : f32
    %12 = vector.broadcast %cst_5 : f32 to vector<1x1x256xf32>
    %13 = arith.addf %11, %12 : vector<1x1x256xf32>
    %14 = math.rsqrt %13 : vector<1x1x256xf32>
    %c0_6 = arith.constant 0 : index
    %c0_7 = arith.constant 0 : index
    %15 = vector.load %arg3[%c0_6, %c0_7] : memref<64x1xf32, #tpu.memory_space<vmem>>, vector<64x1xf32>
    %16 = vector.shape_cast %15 : vector<64x1xf32> to vector<1x64x1xf32>
    %c0_8 = arith.constant 0 : index
    %c0_9 = arith.constant 0 : index
    %17 = vector.load %arg4[%c0_8, %c0_9] : memref<64x1xf32, #tpu.memory_space<vmem>>, vector<64x1xf32>
    %18 = vector.shape_cast %17 : vector<64x1xf32> to vector<1x64x1xf32>
    %19 = vector.broadcast %14 : vector<1x1x256xf32> to vector<1x64x256xf32>
    %20 = arith.mulf %6, %19 : vector<1x64x256xf32>
    %21 = vector.broadcast %16 : vector<1x64x1xf32> to vector<1x64x256xf32>
    %22 = arith.mulf %21, %20 : vector<1x64x256xf32>
    %23 = vector.broadcast %18 : vector<1x64x1xf32> to vector<1x64x256xf32>
    %24 = arith.addf %22, %23 : vector<1x64x256xf32>
    %c0_10 = arith.constant 0 : index
    %c0_11 = arith.constant 0 : index
    %c0_12 = arith.constant 0 : index
    %25 = vector.load %arg5[%c0_10, %c0_11, %c0_12] : memref<1x64x256xf32, #tpu.memory_space<vmem>>, vector<1x64x256xf32>
    tpu.vector_store %arg5[%c0_10, %c0_11, %c0_12], %24 {strides = array<i32>} : memref<1x64x256xf32, #tpu.memory_space<vmem>>, vector<1x64x256xf32>,
    return
  }
  func.func @transform_0(%arg0: i32, %arg1: i32) -> (i32, i32, i32) {
    %c0_i32 = arith.constant 0 : i32
    %c0_i32_0 = arith.constant 0 : i32
    return %arg0, %c0_i32, %arg1 : i32, i32, i32
  }
  func.func @transform_1(%arg0: i32, %arg1: i32) -> (i32, i32) {
    %c0_i32 = arith.constant 0 : i32
    %c0_i32_0 = arith.constant 0 : i32
    %c0_i32_1 = arith.constant 0 : i32
    return %c0_i32, %c0_i32_0 : i32, i32
  }
  func.func @transform_2(%arg0: i32, %arg1: i32) -> (i32, i32) {
    %c0_i32 = arith.constant 0 : i32
    %c0_i32_0 = arith.constant 0 : i32
    %c0_i32_1 = arith.constant 0 : i32
    return %c0_i32, %c0_i32_0 : i32, i32
  }
  func.func @transform_3(%arg0: i32, %arg1: i32) -> (i32, i32, i32) {
    %c0_i32 = arith.constant 0 : i32
    %c0_i32_0 = arith.constant 0 : i32
    return %arg0, %c0_i32, %arg1 : i32, i32, i32
  }
}

</mosaic_0001>

<llo_original>
// kernel: _lambda_.1
$region0: #{_lambda_.1}
  #allocation0 [shape = 'u32[]', space=smem, size = 0x4, offset = 0x4, fixed_abs, tag = 'smem constant byte address 0x4 - core index']
  #allocation1 [shape = 'u32[72,128]{1,0:T(1,128)}', space=vmem, size = 0x9000, scoped, tag = 'internal scratch']
  %s0 = inlined_call_operand.vmem [shape: f32[2,64,256], index: 0, kind: input, shape index: {}]
  %s1 = inlined_call_operand.vmem [shape: f32[64,1], index: 1, kind: input, shape index: {}]
  %s2 = inlined_call_operand.vmem [shape: f32[64,1], index: 2, kind: input, shape index: {}]
  %s3 = inlined_call_operand.vmem [shape: f32[2,64,256], index: 3, kind: output, shape index: {}]
  %s4 = sld [smem:[#allocation0]]
  $region45: #{_lambda_.1} parent=0
    _
  %s6 = ssub.s32 1, %s4
  %s7 = scalar_select 0, %s6, %s4
  loop: start=0, step=1, limit=4
  $region2: #{_lambda_.1} parent=0 // loop_pre_header
    _
  $region3: #{_lambda_.1} parent=0 // loop_header
    %s9 = sphi 0, %s13
    %p10 = scmp.ge.s32.totalorder %s9, 4
    %s16 = sphi 0, %s28
    %s17 = sphi 0, %s24
    %s18 = sphi 0, %s16
    %s19 = sphi 0, %s17
    %s20 = sphi 0, %s18
    %s21 = sphi 0, %s19
    %s33 = sphi 0, %s35
    %s36 = sphi 0, %s33
    %s37 = sphi 0, %s36
    %s53 = sphi 0, %s37
    %s57 = sphi 0, %s57
    %s59 = sphi 0, %s57
    %s60 = sphi 0, %s59
    %s74 = sphi 0, %s60
    %s78 = sphi 0, %s78
    %s80 = sphi 0, %s78
    %s81 = sphi 0, %s80
    %s95 = sphi 0, %s81
    %s103 = sphi 0, %s105
    %s106 = sphi 0, %s103
    %s107 = sphi 0, %s106
    %s123 = sphi 0, %s107
  $region4: #{_lambda_.1} parent=0 // loop_header_branch
    %12 = sbr.rel (%p10) target = $region8
  $region5: #{_lambda_.1} parent=0 // loop_body
    %s14 = ssub.s32 %s9, 1
    %s15 = ssub.s32 %s9, 2
    %s22 = sadd.s32 1, %s17
    %p23 = scmp.ge.s32.totalorder %s22, 1
    %s24 = scalar_select %p23, 0, %s22
    %s25 = sadd.s32 1, %s16
    %s26 = scalar_select %p23, %s25, %s16
    %p27 = scmp.ge.s32.totalorder %s26, 2
    %s28 = scalar_select %p27, 0, %s26
    %s29 = ssub.s32 %s16, %s28
    %s30 = ssub.s32 %s17, %s24
    %s31 = sor.u32 %s29, %s30
    %p32 = scmp.eq.s32.totalorder %s31, 0
    %s34 = sadd.s32 %s33, 1
    %s35 = scalar_select %p32, %s33, %s34
    %p38 = pneg %p32
    %p39 = scmp.eq.s32.totalorder %s9, 1
    %p40 = por %p38, %p39
    %p41 = scmp.ne.s32.totalorder %s33, %s36
    %p42 = scmp.eq.s32.totalorder %s9, 0
    %p43 = por %p41, %p42
    %p44 = scmp.ne.s32.totalorder %s33, %s36
    %p45 = scmp.eq.s32.totalorder %s14, 1
    %p46 = por %p44, %p45
    %p47 = scmp.ne.s32.totalorder %s36, %s37
    %p48 = scmp.eq.s32.totalorder %s14, 0
    %p49 = por %p47, %p48
    %p50 = scmp.ne.s32.totalorder %s36, %s37
    %p51 = scmp.eq.s32.totalorder %s15, 1
    %p52 = por %p50, %p51
    %p54 = scmp.ne.s32.totalorder %s37, %s53
    %p55 = scmp.eq.s32.totalorder %s15, 0
    %p56 = por %p54, %p55
    %s58 = sadd.s32 %s57, 1
    %p61 = scmp.eq.s32.totalorder %s9, 1
    %p62 = scmp.ne.s32.totalorder %s57, %s59
    %p63 = scmp.eq.s32.totalorder %s9, 0
    %p64 = por %p62, %p63
    %p65 = scmp.ne.s32.totalorder %s57, %s59
    %p66 = scmp.eq.s32.totalorder %s14, 1
    %p67 = por %p65, %p66
    %p68 = scmp.ne.s32.totalorder %s59, %s60
    %p69 = scmp.eq.s32.totalorder %s14, 0
    %p70 = por %p68, %p69
    %p71 = scmp.ne.s32.totalorder %s59, %s60
    %p72 = scmp.eq.s32.totalorder %s15, 1
    %p73 = por %p71, %p72
    %p75 = scmp.ne.s32.totalorder %s60, %s74
    %p76 = scmp.eq.s32.totalorder %s15, 0
    %p77 = por %p75, %p76
    %s79 = sadd.s32 %s78, 1
    %p82 = scmp.eq.s32.totalorder %s9, 1
    %p83 = scmp.ne.s32.totalorder %s78, %s80
    %p84 = scmp.eq.s32.totalorder %s9, 0
    %p85 = por %p83, %p84
    %p86 = scmp.ne.s32.totalorder %s78, %s80
    %p87 = scmp.eq.s32.totalorder %s14, 1
    %p88 = por %p86, %p87
    %p89 = scmp.ne.s32.totalorder %s80, %s81
    %p90 = scmp.eq.s32.totalorder %s14, 0
    %p91 = por %p89, %p90
    %p92 = scmp.ne.s32.totalorder %s80, %s81
    %p93 = scmp.eq.s32.totalorder %s15, 1
    %p94 = por %p92, %p93
    %p96 = scmp.ne.s32.totalorder %s81, %s95
    %p97 = scmp.eq.s32.totalorder %s15, 0
    %p98 = por %p96, %p97
    %s99 = ssub.s32 %s16, %s28
    %s100 = ssub.s32 %s17, %s24
    %s101 = sor.u32 %s99, %s100
    %p102 = scmp.eq.s32.totalorder %s101, 0
    %s104 = sadd.s32 %s103, 1
    %s105 = scalar_select %p102, %s103, %s104
    %p108 = pneg %p102
    %p109 = scmp.eq.s32.totalorder %s9, 1
    %p110 = por %p108, %p109
    %p111 = scmp.ne.s32.totalorder %s103, %s106
    %p112 = scmp.eq.s32.totalorder %s9, 0
    %p113 = por %p111, %p112
    %p114 = scmp.ne.s32.totalorder %s103, %s106
    %p115 = scmp.eq.s32.totalorder %s14, 1
    %p116 = por %p114, %p115
    %p117 = scmp.ne.s32.totalorder %s106, %s107
    %p118 = scmp.eq.s32.totalorder %s14, 0
    %p119 = por %p117, %p118
    %p120 = scmp.ne.s32.totalorder %s106, %s107
    %p121 = scmp.eq.s32.totalorder %s15, 1
    %p122 = por %p120, %p121
    %p124 = scmp.ne.s32.totalorder %s107, %s123
    %p125 = scmp.eq.s32.totalorder %s15, 0
    %p126 = por %p124, %p125
    %p127 = scmp.le.s32.totalorder 1, %s9
    %p128 = scmp.lt.s32.totalorder %s9, 3
    %p129 = pnand %p127, %p128
    %p130 = pneg %p129
    // Predicated region
    $region9: #{_lambda_.1} parent=5 // pred_check
      _
    $region10: #{_lambda_.1} parent=5 // pred_check_branch
      %132 = sbr.rel (%p129) target = $region12
    $region11: #{_lambda_.1} parent=5 // pred_region
      %s133 = ssub.s32 %s9, 1
      // Predicated region
      $region13: #{_lambda_.1} parent=11 // pred_check
        %p134 = pneg %p70
      $region14: #{_lambda_.1} parent=11 // pred_check_branch
        %136 = sbr.rel (%p134) target = $region16
      $region15: #{_lambda_.1} parent=11 // pred_region
        _
      $region16: #{_lambda_.1} parent=11 // pred_fallthru
        _
      // Predicated region
      $region17: #{_lambda_.1} parent=11 // pred_check
        %p137 = pneg %p91
      $region18: #{_lambda_.1} parent=11 // pred_check_branch
        %139 = sbr.rel (%p137) target = $region20
      $region19: #{_lambda_.1} parent=11 // pred_region
        _
      $region20: #{_lambda_.1} parent=11 // pred_fallthru
        _
    $region12: #{_lambda_.1} parent=5 // pred_fallthru
      _
    %p140 = scmp.lt.s32.totalorder %s9, 2
    // Predicated region
    $region21: #{_lambda_.1} parent=5 // pred_check
      %p141 = pneg %p140
    $region22: #{_lambda_.1} parent=5 // pred_check_branch
      %143 = sbr.rel (%p141) target = $region24
    $region23: #{_lambda_.1} parent=5 // pred_region
      // Predicated region
      $region25: #{_lambda_.1} parent=23 // pred_check
        %p144 = pneg %p43
      $region26: #{_lambda_.1} parent=23 // pred_check_branch
        %146 = sbr.rel (%p144) target = $region28
      $region27: #{_lambda_.1} parent=23 // pred_region
        %s147 = smul.u32 2, %s17
        %p148 = scmp.lt.s32.totalorder %s16, 1
        %s149 = scalar_select %p148, %s16, 1
        %p150 = scmp.lt.s32.totalorder %s147, 1
        %s151 = scalar_select %p150, %s147, 1
        %s152 = smul.addr %s149, 16
        %s153 = sadd.s32 %s151, %s152
        %s154 = smul.addr %s153, 8
        %s155 = scalar_lea.vmem %s0, %s154
        %s156 = smul.u32 2, %s17
      $region28: #{_lambda_.1} parent=23 // pred_fallthru
        _
    $region24: #{_lambda_.1} parent=5 // pred_fallthru
      _
    %p157 = scmp.le.s32.totalorder 1, %s9
    %p158 = scmp.lt.s32.totalorder %s9, 3
    %p159 = pnand %p157, %p158
    %p160 = pneg %p159
    // Predicated region
    $region29: #{_lambda_.1} parent=5 // pred_check
      _
    $region30: #{_lambda_.1} parent=5 // pred_check_branch
      %162 = sbr.rel (%p159) target = $region32
    $region31: #{_lambda_.1} parent=5 // pred_region
      %s163 = ssub.s32 %s9, 1
      %s164 = smul.u32 2, %s19
      %p165 = scmp.lt.s32.totalorder %s18, 1
      %s166 = scalar_select %p165, %s18, 1
      %p167 = scmp.lt.s32.totalorder %s164, 1
      %s168 = scalar_select %p167, %s164, 1
      %s169 = smul.addr %s166, 16
      %s170 = sadd.s32 %s168, %s169
      %s171 = smul.addr %s170, 8
      %s172 = scalar_lea.vmem %s0, %s171
      %p173 = pneg %p49
      %p174 = pneg %p46
      %p175 = pneg %p70
      %p176 = pneg %p67
      %p177 = pneg %p91
      %p178 = pneg %p88
      %p179 = pneg %p119
      %p180 = pneg %p116
      %s181 = smul.u32 2, %s19
      %p182 = scmp.lt.s32.totalorder %s18, 1
      %s183 = scalar_select %p182, %s18, 1
      %p184 = scmp.lt.s32.totalorder %s181, 1
      %s185 = scalar_select %p184, %s181, 1
      %s186 = smul.addr %s183, 16
      %s187 = sadd.s32 %s185, %s186
      %s188 = smul.addr %s187, 8
      %s189 = scalar_lea.vmem %s3, %s188
      %s190 = smul.u32 2, %s19
      %p191 = scmp.lt.s32.totalorder %s18, 1
      %s192 = scalar_select %p191, %s18, 1
      %p193 = scmp.lt.s32.totalorder %s190, 1
      %s194 = scalar_select %p193, %s190, 1
      %s195 = smul.addr %s192, 16
      %s196 = sadd.s32 %s194, %s195
      %s197 = smul.addr %s196, 8
      %s198 = scalar_lea.vmem %s0, %s197
      %s199 = smul.u32 2, %s19
      %s200 = smul.u32 2, %s19
      %p201 = scmp.lt.s32.totalorder %s18, 1
      %s202 = scalar_select %p201, %s18, 1
      %p203 = scmp.lt.s32.totalorder %s200, 1
      %s204 = scalar_select %p203, %s200, 1
      %s205 = smul.addr %s202, 16
      %s206 = sadd.s32 %s204, %s205
      %s207 = smul.addr %s206, 8
      %s208 = scalar_lea.vmem %s3, %s207
      %s209 = smul.u32 2, %s19
      %v210 = vld [vmem:[%s198] sm:$0xff]
      %v211 = vld [vmem:[%s198 + $0x8] sm:$0xff]
      %v212 = vld [vmem:[%s198 + $0x10] sm:$0xff]
      %v213 = vld [vmem:[%s198 + $0x18] sm:$0xff]
      %v214 = vld [vmem:[%s198 + $0x20] sm:$0xff]
      %v215 = vld [vmem:[%s198 + $0x28] sm:$0xff]
      %v216 = vld [vmem:[%s198 + $0x30] sm:$0xff]
      %v217 = vld [vmem:[%s198 + $0x38] sm:$0xff]
      %v218 = vld [vmem:[%s198 + $0x40] sm:$0xff]
      %v219 = vld [vmem:[%s198 + $0x48] sm:$0xff]
      %v220 = vld [vmem:[%s198 + $0x50] sm:$0xff]
      %v221 = vld [vmem:[%s198 + $0x58] sm:$0xff]
      %v222 = vld [vmem:[%s198 + $0x60] sm:$0xff]
      %v223 = vld [vmem:[%s198 + $0x68] sm:$0xff]
      %v224 = vld [vmem:[%s198 + $0x70] sm:$0xff]
      %v225 = vld [vmem:[%s198 + $0x78] sm:$0xff]
      %v226 = vadd.f32 %v210, %v212
      %v227 = vadd.f32 %v226, %v214
      %v228 = vadd.f32 %v227, %v216
      %v229 = vadd.f32 %v228, %v218
      %v230 = vadd.f32 %v229, %v220
      %v231 = vadd.f32 %v230, %v222
      %v232 = vadd.f32 %v231, %v224
      %v233 = vrot.slane %v232, 4
      %v234 = vadd.f32 %v232, %v233
      %v235 = vrot.slane %v234, 2
      %v236 = vadd.f32 %v234, %v235
      %v237 = vrot.slane %v236, 1
      %v238 = vadd.f32 %v236, %v237
      %v239 = vadd.f32 %v211, %v213
      %v240 = vadd.f32 %v239, %v215
      %v241 = vadd.f32 %v240, %v217
      %v242 = vadd.f32 %v241, %v219
      %v243 = vadd.f32 %v242, %v221
      %v244 = vadd.f32 %v243, %v223
      %v245 = vadd.f32 %v244, %v225
      %v246 = vrot.slane %v245, 4
      %v247 = vadd.f32 %v245, %v246
      %v248 = vrot.slane %v247, 2
      %v249 = vadd.f32 %v247, %v248
      %v250 = vrot.slane %v249, 1
      %v251 = vadd.f32 %v249, %v250
      %v252 = vrcp.pop 64.0
      %v253 = vmul.f32 64.0, %v252
      %v254 = vsub.f32 1.0, %v253
      %v255 = vmul.f32 %v252, %v254
      %v256 = vadd.f32 %v252, %v255
      %vm257 = vweird.f32 %v252
      %v258 = vsel %vm257, %v252, %v256
      %v259 = vmul.f32 %v238, %v258
      %v260 = vmul.f32 %v251, %v258
      %v261 = vsub.f32 %v210, %v259
      %v262 = vsub.f32 %v211, %v260
      %v263 = vsub.f32 %v212, %v259
      %v264 = vsub.f32 %v213, %v260
      %v265 = vsub.f32 %v214, %v259
      %v266 = vsub.f32 %v215, %v260
      %v267 = vsub.f32 %v216, %v259
      %v268 = vsub.f32 %v217, %v260
      %v269 = vsub.f32 %v218, %v259
      %v270 = vsub.f32 %v219, %v260
      %v271 = vsub.f32 %v220, %v259
      %v272 = vsub.f32 %v221, %v260
      %v273 = vsub.f32 %v222, %v259
      %v274 = vsub.f32 %v223, %v260
      %v275 = vsub.f32 %v224, %v259
      %v276 = vsub.f32 %v225, %v260
      %v277 = vmul.f32 %v261, %v261
      %v278 = vmul.f32 %v262, %v262
      %v279 = vmul.f32 %v263, %v263
      %v280 = vmul.f32 %v264, %v264
      %v281 = vmul.f32 %v265, %v265
      %v282 = vmul.f32 %v266, %v266
      %v283 = vmul.f32 %v267, %v267
      %v284 = vmul.f32 %v268, %v268
      %v285 = vmul.f32 %v269, %v269
      %v286 = vmul.f32 %v270, %v270
      %v287 = vmul.f32 %v271, %v271
      %v288 = vmul.f32 %v272, %v272
      %v289 = vmul.f32 %v273, %v273
      %v290 = vmul.f32 %v274, %v274
      %v291 = vmul.f32 %v275, %v275
      %v292 = vmul.f32 %v276, %v276
      %v293 = vadd.f32 %v277, %v279
      %v294 = vadd.f32 %v293, %v281
      %v295 = vadd.f32 %v294, %v283
      %v296 = vadd.f32 %v295, %v285
      %v297 = vadd.f32 %v296, %v287
      %v298 = vadd.f32 %v297, %v289
      %v299 = vadd.f32 %v298, %v291
      %v300 = vrot.slane %v299, 4
      %v301 = vadd.f32 %v299, %v300
      %v302 = vrot.slane %v301, 2
      %v303 = vadd.f32 %v301, %v302
      %v304 = vrot.slane %v303, 1
      %v305 = vadd.f32 %v303, %v304
      %v306 = vadd.f32 %v278, %v280
      %v307 = vadd.f32 %v306, %v282
      %v308 = vadd.f32 %v307, %v284
      %v309 = vadd.f32 %v308, %v286
      %v310 = vadd.f32 %v309, %v288
      %v311 = vadd.f32 %v310, %v290
      %v312 = vadd.f32 %v311, %v292
      %v313 = vrot.slane %v312, 4
      %v314 = vadd.f32 %v312, %v313
      %v315 = vrot.slane %v314, 2
      %v316 = vadd.f32 %v314, %v315
      %v317 = vrot.slane %v316, 1
      %v318 = vadd.f32 %v316, %v317
      %v319 = vmul.f32 %v305, %v258
      %v320 = vmul.f32 %v318, %v258
      %v321 = vadd.f32 %v319, 1e-06
      %v322 = vadd.f32 %v320, 1e-06
      %v323 = vrsqrt.pop %v321
      %v324 = vmul.f32 %v323, %v321
      %v325 = vmul.f32 %v324, %v323
      %v326 = vmul.f32 0.5, %v325
      %v327 = vsub.f32 1.5, %v326
      %v328 = vmul.f32 %v323, %v327
      %vm329 = vweird.f32 %v321
      %vm330 = vweird.f32 %v323
      %vm331 = vmor %vm329, %vm330
      %v332 = vsel %vm331, %v323, %v328
      %v333 = vrsqrt.pop %v322
      %v334 = vmul.f32 %v333, %v322
      %v335 = vmul.f32 %v334, %v333
      %v336 = vmul.f32 0.5, %v335
      %v337 = vsub.f32 1.5, %v336
      %v338 = vmul.f32 %v333, %v337
      %vm339 = vweird.f32 %v322
      %vm340 = vweird.f32 %v333
      %vm341 = vmor %vm339, %vm340
      %v342 = vsel %vm341, %v333, %v338
      %v343 = vld [vmem:[%s1] sm:$0xff]
      %v344 = vld [vmem:[%s1 + $0x8] sm:$0xff]
      %v345 = vld [vmem:[%s1 + $0x10] sm:$0xff]
      %v346 = vld [vmem:[%s1 + $0x18] sm:$0xff]
      %v347 = vld [vmem:[%s1 + $0x20] sm:$0xff]
      %v348 = vld [vmem:[%s1 + $0x28] sm:$0xff]
      %v349 = vld [vmem:[%s1 + $0x30] sm:$0xff]
      %v350 = vld [vmem:[%s1 + $0x38] sm:$0xff]
      %v351 = vld [vmem:[%s2] sm:$0xff]
      %v352 = vld [vmem:[%s2 + $0x8] sm:$0xff]
      %v353 = vld [vmem:[%s2 + $0x10] sm:$0xff]
      %v354 = vld [vmem:[%s2 + $0x18] sm:$0xff]
      %v355 = vld [vmem:[%s2 + $0x20] sm:$0xff]
      %v356 = vld [vmem:[%s2 + $0x28] sm:$0xff]
      %v357 = vld [vmem:[%s2 + $0x30] sm:$0xff]
      %v358 = vld [vmem:[%s2 + $0x38] sm:$0xff]
      %v359 = vmul.f32 %v261, %v332
      %v360 = vmul.f32 %v262, %v342
      %v361 = vmul.f32 %v263, %v332
      %v362 = vmul.f32 %v264, %v342
      %v363 = vmul.f32 %v265, %v332
      %v364 = vmul.f32 %v266, %v342
      %v365 = vmul.f32 %v267, %v332
      %v366 = vmul.f32 %v268, %v342
      %v367 = vmul.f32 %v269, %v332
      %v368 = vmul.f32 %v270, %v342
      %v369 = vmul.f32 %v271, %v332
      %v370 = vmul.f32 %v272, %v342
      %v371 = vmul.f32 %v273, %v332
      %v372 = vmul.f32 %v274, %v342
      %v373 = vmul.f32 %v275, %v332
      %v374 = vmul.f32 %v276, %v342
      %376 = vset.pattern.permute.xlu0 0
      %377 = vperm.xlu0 %376, %v343
      %v378 = vpop.permute.xlu0 %377
      %381 = vset.pattern.permute.xlu0 0
      %382 = vperm.xlu0 %381, %v344
      %v383 = vpop.permute.xlu0 %382
      %386 = vset.pattern.permute.xlu0 0
      %387 = vperm.xlu0 %386, %v345
      %v388 = vpop.permute.xlu0 %387
      %391 = vset.pattern.permute.xlu0 0
      %392 = vperm.xlu0 %391, %v346
      %v393 = vpop.permute.xlu0 %392
      %396 = vset.pattern.permute.xlu0 0
      %397 = vperm.xlu0 %396, %v347
      %v398 = vpop.permute.xlu0 %397
      %401 = vset.pattern.permute.xlu0 0
      %402 = vperm.xlu0 %401, %v348
      %v403 = vpop.permute.xlu0 %402
      %406 = vset.pattern.permute.xlu0 0
      %407 = vperm.xlu0 %406, %v349
      %v408 = vpop.permute.xlu0 %407
      %411 = vset.pattern.permute.xlu0 0
      %412 = vperm.xlu0 %411, %v350
      %v413 = vpop.permute.xlu0 %412
      %v415 = vmul.f32 %v378, %v359
      %v416 = vmul.f32 %v378, %v360
      %v417 = vmul.f32 %v383, %v361
      %v418 = vmul.f32 %v383, %v362
      %v419 = vmul.f32 %v388, %v363
      %v420 = vmul.f32 %v388, %v364
      %v421 = vmul.f32 %v393, %v365
      %v422 = vmul.f32 %v393, %v366
      %v423 = vmul.f32 %v398, %v367
      %v424 = vmul.f32 %v398, %v368
      %v425 = vmul.f32 %v403, %v369
      %v426 = vmul.f32 %v403, %v370
      %v427 = vmul.f32 %v408, %v371
      %v428 = vmul.f32 %v408, %v372
      %v429 = vmul.f32 %v413, %v373
      %v430 = vmul.f32 %v413, %v374
      %432 = vset.pattern.permute.xlu0 0
      %433 = vperm.xlu0 %432, %v351
      %v434 = vpop.permute.xlu0 %433
      %437 = vset.pattern.permute.xlu0 0
      %438 = vperm.xlu0 %437, %v352
      %v439 = vpop.permute.xlu0 %438
      %442 = vset.pattern.permute.xlu0 0
      %443 = vperm.xlu0 %442, %v353
      %v444 = vpop.permute.xlu0 %443
      %447 = vset.pattern.permute.xlu0 0
      %448 = vperm.xlu0 %447, %v354
      %v449 = vpop.permute.xlu0 %448
      %452 = vset.pattern.permute.xlu0 0
      %453 = vperm.xlu0 %452, %v355
      %v454 = vpop.permute.xlu0 %453
      %457 = vset.pattern.permute.xlu0 0
      %458 = vperm.xlu0 %457, %v356
      %v459 = vpop.permute.xlu0 %458
      %462 = vset.pattern.permute.xlu0 0
      %463 = vperm.xlu0 %462, %v357
      %v464 = vpop.permute.xlu0 %463
      %467 = vset.pattern.permute.xlu0 0
      %468 = vperm.xlu0 %467, %v358
      %v469 = vpop.permute.xlu0 %468
      %v471 = vadd.f32 %v415, %v434
      %v472 = vadd.f32 %v416, %v434
      %v473 = vadd.f32 %v417, %v439
      %v474 = vadd.f32 %v418, %v439
      %v475 = vadd.f32 %v419, %v444
      %v476 = vadd.f32 %v420, %v444
      %v477 = vadd.f32 %v421, %v449
      %v478 = vadd.f32 %v422, %v449
      %v479 = vadd.f32 %v423, %v454
      %v480 = vadd.f32 %v424, %v454
      %v481 = vadd.f32 %v425, %v459
      %v482 = vadd.f32 %v426, %v459
      %v483 = vadd.f32 %v427, %v464
      %v484 = vadd.f32 %v428, %v464
      %v485 = vadd.f32 %v429, %v469
      %v486 = vadd.f32 %v430, %v469
      %487 = vst [vmem:[%s208] sm:$0xff] %v471
      %488 = vst [vmem:[%s208 + $0x8] sm:$0xff] %v472
      %489 = vst [vmem:[%s208 + $0x10] sm:$0xff] %v473
      %490 = vst [vmem:[%s208 + $0x18] sm:$0xff] %v474
      %491 = vst [vmem:[%s208 + $0x20] sm:$0xff] %v475
      %492 = vst [vmem:[%s208 + $0x28] sm:$0xff] %v476
      %493 = vst [vmem:[%s208 + $0x30] sm:$0xff] %v477
      %494 = vst [vmem:[%s208 + $0x38] sm:$0xff] %v478
      %495 = vst [vmem:[%s208 + $0x40] sm:$0xff] %v479
      %496 = vst [vmem:[%s208 + $0x48] sm:$0xff] %v480
      %497 = vst [vmem:[%s208 + $0x50] sm:$0xff] %v481
      %498 = vst [vmem:[%s208 + $0x58] sm:$0xff] %v482
      %499 = vst [vmem:[%s208 + $0x60] sm:$0xff] %v483
      %500 = vst [vmem:[%s208 + $0x68] sm:$0xff] %v484
      %501 = vst [vmem:[%s208 + $0x70] sm:$0xff] %v485
      %502 = vst [vmem:[%s208 + $0x78] sm:$0xff] %v486
      %s503 = smul.u32 2, %s19
      %p504 = scmp.lt.s32.totalorder %s18, 1
      %s505 = scalar_select %p504, %s18, 1
      %p506 = scmp.lt.s32.totalorder %s503, 1
      %s507 = scalar_select %p506, %s503, 1
      %s508 = smul.addr %s505, 16
      %s509 = sadd.s32 %s507, %s508
      %s510 = smul.addr %s509, 8
      %s511 = scalar_lea.vmem %s3, %s510
      // Predicated region
      $region33: #{_lambda_.1} parent=31 // pred_check
        %p512 = pneg %p116
      $region34: #{_lambda_.1} parent=31 // pred_check_branch
        %514 = sbr.rel (%p512) target = $region36
      $region35: #{_lambda_.1} parent=31 // pred_region
        %s515 = smul.u32 2, %s19
      $region36: #{_lambda_.1} parent=31 // pred_fallthru
        _
    $region32: #{_lambda_.1} parent=5 // pred_fallthru
      _
    %p516 = scmp.le.s32.totalorder 2, %s9
    // Predicated region
    $region37: #{_lambda_.1} parent=5 // pred_check
      %p517 = pneg %p516
    $region38: #{_lambda_.1} parent=5 // pred_check_branch
      %519 = sbr.rel (%p517) target = $region40
    $region39: #{_lambda_.1} parent=5 // pred_region
      %s520 = ssub.s32 %s9, 2
      // Predicated region
      $region41: #{_lambda_.1} parent=39 // pred_check
        %p521 = pneg %p122
      $region42: #{_lambda_.1} parent=39 // pred_check_branch
        %523 = sbr.rel (%p521) target = $region44
      $region43: #{_lambda_.1} parent=39 // pred_region
        %s524 = smul.u32 2, %s21
        %p525 = scmp.lt.s32.totalorder %s20, 1
        %s526 = scalar_select %p525, %s20, 1
        %p527 = scmp.lt.s32.totalorder %s524, 1
        %s528 = scalar_select %p527, %s524, 1
        %s529 = smul.addr %s526, 16
        %s530 = sadd.s32 %s528, %s529
        %s531 = smul.addr %s530, 8
        %s532 = scalar_lea.vmem %s3, %s531
      $region44: #{_lambda_.1} parent=39 // pred_fallthru
        _
    $region40: #{_lambda_.1} parent=5 // pred_fallthru
      _
  $region6: #{_lambda_.1} parent=0 // loop_footer
    %s13 = sadd.s32 1, %s9
  $region7: #{_lambda_.1} parent=0 // loop_footer_branch
    %8 = sbr.rel target = $region3
  $region8: #{_lambda_.1} parent=0 // loop_exit
    _

</llo_original>
